<compile_context>
chip_gen: v6e
topology: v6e:2x2x1
jax: 0.10.0
libtpu: 0.0.40
codegen_flags: <defaults>
</compile_context>

<pallas_src>
import functools
import math

import jax
import jax.numpy as jnp
from jax.experimental import pallas as pl
from jax.experimental.pallas import tpu as pltpu


# ----------------------------------------------------------------------------
# Kernel 1: batch-norm statistics (training-mode batch stats).
# x block (1, CG, TILE_S); lane/sublane-dense (CG, TILE_S) partial sums are
# accumulated in the resident output blocks (block index constant over grid).
# ----------------------------------------------------------------------------
def stats_kernel(x_ref, s_ref, ss_ref):
    @pl.when(jnp.logical_and(pl.program_id(0) == 0, pl.program_id(1) == 0))
    def _():
        s_ref[...] = jnp.zeros_like(s_ref)
        ss_ref[...] = jnp.zeros_like(ss_ref)

    x = x_ref[0].astype(jnp.float32)        # (CG, TILE_S), f32 accumulation
    s_ref[...] += x
    ss_ref[...] += x * x


# ----------------------------------------------------------------------------
# Kernel 2: fused normalization + continuous-conditional affine.
#   scale = Wg' @ cats'      (bias + inv_std folded; ones-row carries bias)
#   shift = Wb' @ cats'      (bias + mean*inv_std folded)
#   out   = x * scale + shift
# ----------------------------------------------------------------------------
def ccbn_kernel(x_ref, cats_ref, wg_ref, wb_ref, o_ref):
    x = x_ref[0].astype(jnp.float32)        # (CD, T)   f32 math (v5e-safe)
    cats = cats_ref[0]                      # (Cin_p, T) f32
    scale = jnp.dot(wg_ref[...], cats, preferred_element_type=jnp.float32)
    shift = jnp.dot(wb_ref[...], cats, preferred_element_type=jnp.float32)
    o_ref[0] = (x * scale + shift).astype(o_ref.dtype)


# ----------------------------------------------------------------------------
# Small host-side helpers.
# ----------------------------------------------------------------------------
def _round_up(n: int, m: int) -> int:
    return ((n + m - 1) // m) * m


def _pick_tile(n: int, target: int) -> int:
    """Largest multiple-of-128 divisor of n that is <= target (or n itself)."""
    if n <= target:
        return n
    t = (min(n, target) // 128) * 128
    while t >= 128:
        if n % t == 0:
            return t
        t -= 128
    return n            # only reached when n is not a multiple of 128


# ----------------------------------------------------------------------------
# Wrapper: reshapes, stats finalization, parameter folding, pallas_calls.
# ----------------------------------------------------------------------------
@functools.partial(jax.jit, static_argnames=("eps", "momentum", "training"))
def ccbn_forward(x, cats, gamma_w, gamma_b, beta_w, beta_b,
                 running_mean, running_var,
                 eps=2e-5, momentum=0.1, training=True):
    B, C, D, H, W = x.shape
    Cin = cats.shape[1]
    HW = H * W
    CD = C * D
    itemsize = x.dtype.itemsize
    f32 = jnp.float32

    # ------------------ batch-norm statistics ------------------
    if training:
        S = D * HW
        # Fold G reduction chunks into the channel axis (free row-major
        # reshape) so sublanes are fully used even when C % 8 != 0.
        G = 8 // math.gcd(C, 8)
        unit = G * 128
        S_pad = S if S % unit == 0 else _round_up(S, unit)
        x_s = x.reshape(B, C, S)                     # free view, no transpose
        if S_pad != S:                               # zeros are exact for sum/sumsq
            x_s = jnp.pad(x_s, ((0, 0), (0, 0), (0, S_pad - S)))
        CG = C * G
        S2 = S_pad // G
        x_s = x_s.reshape(B, CG, S2)                 # free reshape

        tgt_s = max(128, min(8192, (2 << 20) // max(1, 4 * CG)))
        tile_s = _pick_tile(S2, tgt_s)
        stats_vmem = int(min(max(2 * CG * tile_s * itemsize     # x, double-buffered
                                 + 2 * CG * tile_s * 4          # accumulators
                                 + 2 * CG * tile_s * 4          # f32 temps
                                 + (8 << 20),
                                 16 << 20), 48 << 20))
        s, ss = pl.pallas_call(
            stats_kernel,
            out_shape=(jax.ShapeDtypeStruct((CG, tile_s), f32),
                       jax.ShapeDtypeStruct((CG, tile_s), f32)),
            grid=(B, S2 // tile_s),
            in_specs=[pl.BlockSpec((1, CG, tile_s), lambda b, j: (b, 0, j))],
            out_specs=(pl.BlockSpec((CG, tile_s), lambda b, j: (0, 0)),
                       pl.BlockSpec((CG, tile_s), lambda b, j: (0, 0))),
            compiler_params=pltpu.CompilerParams(
                dimension_semantics=("arbitrary", "arbitrary"),
                vmem_limit_bytes=stats_vmem),
        )(x_s)

        n = B * S
        s_c = jnp.sum(s.reshape(C, G, tile_s), axis=(1, 2))
        ss_c = jnp.sum(ss.reshape(C, G, tile_s), axis=(1, 2))
        mean = s_c / n
        # single-pass E[x^2] - E[x]^2 with f32 accumulation (biased var, as
        # F.batch_norm uses for normalization).
        # TODO(synk): use a shifted / two-pass variance if |mean| >> std.
        var = jnp.maximum(ss_c / n - mean * mean, 0.0)

        # Running-buffer EMA (PyTorch uses the unbiased variance here).
        unbiased = var * (n / max(n - 1, 1))
        new_rm = ((1.0 - momentum) * running_mean.astype(f32)
                  + momentum * mean).astype(running_mean.dtype)
        new_rv = ((1.0 - momentum) * running_var.astype(f32)
                  + momentum * unbiased).astype(running_var.dtype)
        # TODO(synk): num_batches_tracked counter and the momentum=None
        # (cumulative moving average) path are host-side and not materialized.
    else:
        mean = running_mean.astype(f32)
        var = running_var.astype(f32)
        new_rm, new_rv = running_mean, running_var

    # ------------------ fold mean / inv_std into the 1x1-conv params ---------
    inv_std = jax.lax.rsqrt(var + eps)
    ms = mean * inv_std
    Wg = gamma_w.reshape(C, Cin).astype(f32)
    Wb = beta_w.reshape(C, Cin).astype(f32)
    bg = gamma_b.astype(f32)
    bb = beta_b.astype(f32)

    Wg_f = inv_std[:, None] * Wg                 # scale folded into gamma
    bg_f = inv_std * bg
    Wb_f = Wb - ms[:, None] * Wg                 # -mean*inv_std folded into beta
    bb_f = bb - ms * bg

    # Bias folded into the matmul (ones-row appended to cats); depth broadcast
    # via row repetition (gamma/beta are shared across D).
    Cin_p = _round_up(Cin + 1, 8)                # sublane-aligned contraction dim
    Wg_all = jnp.repeat(jnp.concatenate([Wg_f, bg_f[:, None]], axis=1), D, axis=0)
    Wb_all = jnp.repeat(jnp.concatenate([Wb_f, bb_f[:, None]], axis=1), D, axis=0)
    if Cin_p > Cin + 1:
        pad_c = ((0, 0), (0, Cin_p - Cin - 1))
        Wg_all = jnp.pad(Wg_all, pad_c)          # (CD, Cin_p)
        Wb_all = jnp.pad(Wb_all, pad_c)          # (CD, Cin_p)

    cats_r = cats.reshape(B, Cin, HW).astype(f32)
    cats_r = jnp.concatenate([cats_r, jnp.ones((B, 1, HW), f32)], axis=1)
    if Cin_p > Cin + 1:
        cats_r = jnp.pad(cats_r, ((0, 0), (0, Cin_p - Cin - 1), (0, 0)))

    # ------------------ fused normalize + affine ------------------
    x_fd = x.reshape(B, CD, HW)                  # free view, no transpose
    HW_pad = HW
    if HW % 128 != 0 and HW > 128:               # pad to lane-dense tiles
        HW_pad = _round_up(HW, 128)
        x_fd = jnp.pad(x_fd, ((0, 0), (0, 0), (0, HW_pad - HW)))
        cats_r = jnp.pad(cats_r, ((0, 0), (0, 0), (0, HW_pad - HW)))

    tgt_hw = max(128, min(16384, (2 << 20) // max(1, CD * itemsize)))
    tile_hw = _pick_tile(HW_pad, tgt_hw)
    # TODO(synk): also tile the C*D axis when C*D*tile_hw alone blows VMEM.

    blk_x = CD * tile_hw * itemsize
    vmem_est = (4 * blk_x                        # x + out, double-buffered
                + 2 * Cin_p * tile_hw * 4        # cats, double-buffered
                + 4 * CD * Cin_p * 4             # weights (resident)
                + 4 * CD * tile_hw * 4)          # f32 temps (x, scale, shift, fma)
    vmem_limit = int(min(max(vmem_est + (8 << 20), 16 << 20), 48 << 20))

    out = pl.pallas_call(
        ccbn_kernel,
        out_shape=jax.ShapeDtypeStruct((B, CD, HW_pad), x.dtype),
        grid=(B, HW_pad // tile_hw),
        in_specs=[
            pl.BlockSpec((1, CD, tile_hw), lambda b, t: (b, 0, t)),      # x
            pl.BlockSpec((1, Cin_p, tile_hw), lambda b, t: (b, 0, t)),   # cats'
            pl.BlockSpec((CD, Cin_p), lambda b, t: (0, 0)),              # Wg'
            pl.BlockSpec((CD, Cin_p), lambda b, t: (0, 0)),              # Wb'
        ],
        out_specs=pl.BlockSpec((1, CD, tile_hw), lambda b, t: (b, 0, t)),
        compiler_params=pltpu.CompilerParams(
            dimension_semantics=("parallel", "parallel"),
            vmem_limit_bytes=vmem_limit),
    )(x_fd, cats_r, Wg_all, Wb_all)

    if HW_pad != HW:
        out = out[:, :, :HW]
    return out.reshape(B, C, D, H, W), new_rm, new_rv


# ----------------------------------------------------------------------------
# Pure-JAX reference (mirrors the PyTorch forward), for validation.
# ----------------------------------------------------------------------------
def ref_forward(x, cats, gamma_w, gamma_b, beta_w, beta_b,
                running_mean, running_var, eps=2e-5, training=True):
    x = x.astype(jnp.float32)
    cats = cats.astype(jnp.float32)
    if training:
        mean = jnp.mean(x, axis=(0, 2, 3, 4))
        var = jnp.var(x, axis=(0, 2, 3, 4))
    else:
        mean, var = running_mean, running_var
    normed = (x - mean[None, :, None, None, None]) / jnp.sqrt(
        var + eps)[None, :, None, None, None]
    C = gamma_w.shape[0]
    Cin = gamma_w.reshape(C, -1).shape[1]
    gw = gamma_w.reshape(C, Cin)
    bw = beta_w.reshape(C, Cin)
    gamma = jnp.einsum('ci,bihw->bchw', gw, cats) + gamma_b[None, :, None, None]
    beta = jnp.einsum('ci,bihw->bchw', bw, cats) + beta_b[None, :, None, None]
    return normed * gamma[:, :, None] + beta[:, :, None]


if __name__ == "__main__":
    # Small shapes: batch=2, num_features=4, depth=8, spatial 16x16, cbn_in_channels=2.
    B, C, D, H, W = 2, 4, 8, 16, 16
    Cin = 2
    key = jax.random.PRNGKey(0)
    kx, kc, kgw, kgb, kbw, kbb = jax.random.split(key, 6)

    x = jax.random.normal(kx, (B, C, D, H, W), dtype=jnp.float32)
    cats = jax.random.normal(kc, (B, Cin, H, W), dtype=jnp.float32)

    # 1x1 Conv2d parameters (weight (C, Cin, 1, 1), bias (C,)).
    gamma_w = 0.5 * jax.random.normal(kgw, (C, Cin, 1, 1), jnp.float32)
    gamma_b = 1.0 + 0.1 * jax.random.normal(kgb, (C,), jnp.float32)
    beta_w = 0.5 * jax.random.normal(kbw, (C, Cin, 1, 1), jnp.float32)
    beta_b = 0.1 * jax.random.normal(kbb, (C,), jnp.float32)

    running_mean = jnp.zeros((C,), jnp.float32)
    running_var = jnp.ones((C,), jnp.float32)

    out, new_rm, new_rv = ccbn_forward(x, cats, gamma_w, gamma_b, beta_w, beta_b,
                                       running_mean, running_var,
                                       eps=2e-5, momentum=0.1, training=True)
    out = jax.block_until_ready(out)

    ref = ref_forward(x, cats, gamma_w, gamma_b, beta_w, beta_b,
                      running_mean, running_var, eps=2e-5, training=True)
    assert out.shape == (B, C, D, H, W)
    assert jnp.allclose(out, ref, rtol=1e-3, atol=1e-3), (
        float(jnp.max(jnp.abs(out - ref))))

    # Eval-mode smoke test (uses running stats; no stats kernel launched).
    out_eval, _, _ = ccbn_forward(x, cats, gamma_w, gamma_b, beta_w, beta_b,
                                  new_rm, new_rv, eps=2e-5, momentum=0.1,
                                  training=False)
    ref_eval = ref_forward(x, cats, gamma_w, gamma_b, beta_w, beta_b,
                           new_rm, new_rv, eps=2e-5, training=False)
    out_eval = jax.block_until_ready(out_eval)
    assert jnp.allclose(out_eval, ref_eval, rtol=1e-3, atol=1e-3)

    print("KERNEL_OK")
</pallas_src>

<mosaic_0001>
module attributes {stable_mosaic.version = 11 : i64} {
  func.func @stats_kernel(%arg0: i32, %arg1: i32, %arg2: memref<1x8x1024xf32, #tpu.memory_space<vmem>>, %arg3: memref<8x1024xf32, #tpu.memory_space<vmem>>, %arg4: memref<8x1024xf32, #tpu.memory_space<vmem>>) attributes {dimension_semantics = [#tpu.dimension_semantics<arbitrary>, #tpu.dimension_semantics<arbitrary>], iteration_bounds = array<i64: 2, 1>, scalar_prefetch = 0 : i64, scratch_operands = 0 : i64, tpu.core_type = #tpu.core_type<tc>, window_params = [{transform_indices = @transform_0, window_bounds = array<i64: 1, 8, 1024>}, {pipeline_mode = #tpu.pipeline_mode<synchronous>, transform_indices = @transform_1, window_bounds = array<i64: 8, 1024>}, {pipeline_mode = #tpu.pipeline_mode<synchronous>, transform_indices = @transform_2, window_bounds = array<i64: 8, 1024>}]} {
    %c0_i32 = arith.constant 0 : i32
    %0 = arith.cmpi eq, %arg0, %c0_i32 : i32
    %c0_i32_0 = arith.constant 0 : i32
    %1 = arith.cmpi eq, %arg1, %c0_i32_0 : i32
    %2 = arith.andi %0, %1 : i1
    %3 = arith.extui %2 : i1 to i32
    %c0_i32_1 = arith.constant 0 : i32
    %4 = arith.cmpi ne, %3, %c0_i32_1 : i32
    scf.if %4 {
      %cst = arith.constant 0.000000e+00 : f32
      %14 = vector.broadcast %cst : f32 to vector<8x1024xf32>
      %c0_12 = arith.constant 0 : index
      %c0_13 = arith.constant 0 : index
      %15 = vector.load %arg3[%c0_12, %c0_13] : memref<8x1024xf32, #tpu.memory_space<vmem>>, vector<8x1024xf32>
      tpu.vector_store %arg3[%c0_12, %c0_13], %14 {strides = array<i32>} : memref<8x1024xf32, #tpu.memory_space<vmem>>, vector<8x1024xf32>,
      %cst_14 = arith.constant 0.000000e+00 : f32
      %16 = vector.broadcast %cst_14 : f32 to vector<8x1024xf32>
      %c0_15 = arith.constant 0 : index
      %c0_16 = arith.constant 0 : index
      %17 = vector.load %arg4[%c0_15, %c0_16] : memref<8x1024xf32, #tpu.memory_space<vmem>>, vector<8x1024xf32>
      tpu.vector_store %arg4[%c0_15, %c0_16], %16 {strides = array<i32>} : memref<8x1024xf32, #tpu.memory_space<vmem>>, vector<8x1024xf32>,
    } else {
    }
    %c0 = arith.constant 0 : index
    %c0_2 = arith.constant 0 : index
    %c0_3 = arith.constant 0 : index
    %5 = vector.load %arg2[%c0, %c0_2, %c0_3] : memref<1x8x1024xf32, #tpu.memory_space<vmem>>, vector<1x8x1024xf32>
    %6 = vector.shape_cast %5 : vector<1x8x1024xf32> to vector<8x1024xf32>
    %c0_4 = arith.constant 0 : index
    %c0_5 = arith.constant 0 : index
    %7 = vector.load %arg3[%c0_4, %c0_5] : memref<8x1024xf32, #tpu.memory_space<vmem>>, vector<8x1024xf32>
    %8 = arith.addf %7, %6 : vector<8x1024xf32>
    %c0_6 = arith.constant 0 : index
    %c0_7 = arith.constant 0 : index
    %9 = vector.load %arg3[%c0_6, %c0_7] : memref<8x1024xf32, #tpu.memory_space<vmem>>, vector<8x1024xf32>
    tpu.vector_store %arg3[%c0_6, %c0_7], %8 {strides = array<i32>} : memref<8x1024xf32, #tpu.memory_space<vmem>>, vector<8x1024xf32>,
    %c0_8 = arith.constant 0 : index
    %c0_9 = arith.constant 0 : index
    %10 = vector.load %arg4[%c0_8, %c0_9] : memref<8x1024xf32, #tpu.memory_space<vmem>>, vector<8x1024xf32>
    %11 = arith.mulf %6, %6 : vector<8x1024xf32>
    %12 = arith.addf %10, %11 : vector<8x1024xf32>
    %c0_10 = arith.constant 0 : index
    %c0_11 = arith.constant 0 : index
    %13 = vector.load %arg4[%c0_10, %c0_11] : memref<8x1024xf32, #tpu.memory_space<vmem>>, vector<8x1024xf32>
    tpu.vector_store %arg4[%c0_10, %c0_11], %12 {strides = array<i32>} : memref<8x1024xf32, #tpu.memory_space<vmem>>, vector<8x1024xf32>,
    return
  }
  func.func @transform_0(%arg0: i32, %arg1: i32) -> (i32, i32, i32) {
    %c0_i32 = arith.constant 0 : i32
    %c0_i32_0 = arith.constant 0 : i32
    return %arg0, %c0_i32, %arg1 : i32, i32, i32
  }
  func.func @transform_1(%arg0: i32, %arg1: i32) -> (i32, i32) {
    %c0_i32 = arith.constant 0 : i32
    %c0_i32_0 = arith.constant 0 : i32
    %c0_i32_1 = arith.constant 0 : i32
    return %c0_i32, %c0_i32_0 : i32, i32
  }
  func.func @transform_2(%arg0: i32, %arg1: i32) -> (i32, i32) {
    %c0_i32 = arith.constant 0 : i32
    %c0_i32_0 = arith.constant 0 : i32
    %c0_i32_1 = arith.constant 0 : i32
    return %c0_i32, %c0_i32_0 : i32, i32
  }
}

module attributes {stable_mosaic.version = 11 : i64} {
  func.func @ccbn_kernel(%arg0: i32, %arg1: i32, %arg2: memref<1x32x256xf32, #tpu.memory_space<vmem>>, %arg3: memref<1x8x256xf32, #tpu.memory_space<vmem>>, %arg4: memref<32x8xf32, #tpu.memory_space<vmem>>, %arg5: memref<32x8xf32, #tpu.memory_space<vmem>>, %arg6: memref<1x32x256xf32, #tpu.memory_space<vmem>>) attributes {dimension_semantics = [#tpu.dimension_semantics<parallel>, #tpu.dimension_semantics<parallel>], iteration_bounds = array<i64: 2, 1>, scalar_prefetch = 0 : i64, scratch_operands = 0 : i64, tpu.core_type = #tpu.core_type<tc>, window_params = [{transform_indices = @transform_0, window_bounds = array<i64: 1, 32, 256>}, {transform_indices = @transform_1, window_bounds = array<i64: 1, 8, 256>}, {pipeline_mode = #tpu.pipeline_mode<synchronous>, transform_indices = @transform_2, window_bounds = array<i64: 32, 8>}, {pipeline_mode = #tpu.pipeline_mode<synchronous>, transform_indices = @transform_3, window_bounds = array<i64: 32, 8>}, {transform_indices = @transform_4, window_bounds = array<i64: 1, 32, 256>}]} {
    %c0 = arith.constant 0 : index
    %c0_0 = arith.constant 0 : index
    %c0_1 = arith.constant 0 : index
    %0 = vector.load %arg2[%c0, %c0_0, %c0_1] : memref<1x32x256xf32, #tpu.memory_space<vmem>>, vector<1x32x256xf32>
    %1 = vector.shape_cast %0 : vector<1x32x256xf32> to vector<32x256xf32>
    %c0_2 = arith.constant 0 : index
    %c0_3 = arith.constant 0 : index
    %c0_4 = arith.constant 0 : index
    %2 = vector.load %arg3[%c0_2, %c0_3, %c0_4] : memref<1x8x256xf32, #tpu.memory_space<vmem>>, vector<1x8x256xf32>
    %3 = vector.shape_cast %2 : vector<1x8x256xf32> to vector<8x256xf32>
    %c0_5 = arith.constant 0 : index
    %c0_6 = arith.constant 0 : index
    %4 = vector.load %arg4[%c0_5, %c0_6] : memref<32x8xf32, #tpu.memory_space<vmem>>, vector<32x8xf32>
    %cst = arith.constant dense<0.000000e+00> : vector<32x256xf32>
    %5 = tpu.matmul %4, %3, %cst {dimension_numbers = #tpu.dot_dimension_numbers<[1], [0], [0], [1], [0, 0, 1, 1], [], []>} : vector<32x8xf32>, vector<8x256xf32>, vector<32x256xf32> -> vector<32x256xf32>
    %c0_7 = arith.constant 0 : index
    %c0_8 = arith.constant 0 : index
    %6 = vector.load %arg5[%c0_7, %c0_8] : memref<32x8xf32, #tpu.memory_space<vmem>>, vector<32x8xf32>
    %cst_9 = arith.constant dense<0.000000e+00> : vector<32x256xf32>
    %7 = tpu.matmul %6, %3, %cst_9 {dimension_numbers = #tpu.dot_dimension_numbers<[1], [0], [0], [1], [0, 0, 1, 1], [], []>} : vector<32x8xf32>, vector<8x256xf32>, vector<32x256xf32> -> vector<32x256xf32>
    %8 = arith.mulf %1, %5 : vector<32x256xf32>
    %9 = arith.addf %8, %7 : vector<32x256xf32>
    %c0_10 = arith.constant 0 : index
    %c0_11 = arith.constant 0 : index
    %c0_12 = arith.constant 0 : index
    %10 = vector.load %arg6[%c0_10, %c0_11, %c0_12] : memref<1x32x256xf32, #tpu.memory_space<vmem>>, vector<1x32x256xf32>
    %11 = vector.shape_cast %10 : vector<1x32x256xf32> to vector<32x256xf32>
    %12 = vector.shape_cast %9 : vector<32x256xf32> to vector<1x32x256xf32>
    tpu.vector_store %arg6[%c0_10, %c0_11, %c0_12], %12 {strides = array<i32>} : memref<1x32x256xf32, #tpu.memory_space<vmem>>, vector<1x32x256xf32>,
    return
  }
  func.func @transform_0(%arg0: i32, %arg1: i32) -> (i32, i32, i32) {
    %c0_i32 = arith.constant 0 : i32
    %c0_i32_0 = arith.constant 0 : i32
    return %arg0, %c0_i32, %arg1 : i32, i32, i32
  }
  func.func @transform_1(%arg0: i32, %arg1: i32) -> (i32, i32, i32) {
    %c0_i32 = arith.constant 0 : i32
    %c0_i32_0 = arith.constant 0 : i32
    return %arg0, %c0_i32, %arg1 : i32, i32, i32
  }
  func.func @transform_2(%arg0: i32, %arg1: i32) -> (i32, i32) {
    %c0_i32 = arith.constant 0 : i32
    %c0_i32_0 = arith.constant 0 : i32
    %c0_i32_1 = arith.constant 0 : i32
    return %c0_i32, %c0_i32_0 : i32, i32
  }
  func.func @transform_3(%arg0: i32, %arg1: i32) -> (i32, i32) {
    %c0_i32 = arith.constant 0 : i32
    %c0_i32_0 = arith.constant 0 : i32
    %c0_i32_1 = arith.constant 0 : i32
    return %c0_i32, %c0_i32_0 : i32, i32
  }
  func.func @transform_4(%arg0: i32, %arg1: i32) -> (i32, i32, i32) {
    %c0_i32 = arith.constant 0 : i32
    %c0_i32_0 = arith.constant 0 : i32
    return %arg0, %c0_i32, %arg1 : i32, i32, i32
  }
}

</mosaic_0001>

<llo_original>
// kernel: ccbn_forward.2
$region0: #{ccbn_forward.2}
  #allocation0 [shape = 'u32[]', space=smem, size = 0x4, offset = 0x4, fixed_abs, tag = 'smem constant byte address 0x4 - core index']
  #allocation1 [shape = 'u32[144,128]{1,0:T(1,128)}', space=vmem, size = 0x12000, scoped, tag = 'internal scratch']
  %s0 = inlined_call_operand.vmem [shape: f32[2,8,1024], index: 0, kind: input, shape index: {}]
  %s1 = inlined_call_operand.vmem [shape: f32[8,1024], index: 1, kind: output, shape index: {0}]
  %s2 = inlined_call_operand.vmem [shape: f32[8,1024], index: 2, kind: output, shape index: {1}]
  %3 = xla_tuple %s1, %s2
  %s4 = sld [smem:[#allocation0]]
  $region49: #{ccbn_forward.2} parent=0
    _
  %s6 = ssub.s32 1, %s4
  %s7 = scalar_select 0, %s6, %s4
  loop: start=0, step=1, limit=4
  $region2: #{ccbn_forward.2} parent=0 // loop_pre_header
    _
  $region3: #{ccbn_forward.2} parent=0 // loop_header
    %s9 = sphi 0, %s13
    %p10 = scmp.ge.s32.totalorder %s9, 4
    %s16 = sphi 0, %s28
    %s17 = sphi 0, %s24
    %s18 = sphi 0, %s16
    %s19 = sphi 0, %s17
    %s20 = sphi 0, %s18
    %s21 = sphi 0, %s19
    %s33 = sphi 0, %s35
    %s36 = sphi 0, %s33
    %s37 = sphi 0, %s36
    %s53 = sphi 0, %s37
    %s57 = sphi 0, %s57
    %s59 = sphi 0, %s57
    %s60 = sphi 0, %s59
    %s74 = sphi 0, %s60
    %s78 = sphi 0, %s78
    %s80 = sphi 0, %s78
    %s81 = sphi 0, %s80
    %s95 = sphi 0, %s81
  $region4: #{ccbn_forward.2} parent=0 // loop_header_branch
    %12 = sbr.rel (%p10) target = $region8
  $region5: #{ccbn_forward.2} parent=0 // loop_body
    %s14 = ssub.s32 %s9, 1
    %s15 = ssub.s32 %s9, 2
    %s22 = sadd.s32 1, %s17
    %p23 = scmp.ge.s32.totalorder %s22, 1
    %s24 = scalar_select %p23, 0, %s22
    %s25 = sadd.s32 1, %s16
    %s26 = scalar_select %p23, %s25, %s16
    %p27 = scmp.ge.s32.totalorder %s26, 2
    %s28 = scalar_select %p27, 0, %s26
    %s29 = ssub.s32 %s16, %s28
    %s30 = ssub.s32 %s17, %s24
    %s31 = sor.u32 %s29, %s30
    %p32 = scmp.eq.s32.totalorder %s31, 0
    %s34 = sadd.s32 %s33, 1
    %s35 = scalar_select %p32, %s33, %s34
    %p38 = pneg %p32
    %p39 = scmp.eq.s32.totalorder %s9, 1
    %p40 = por %p38, %p39
    %p41 = scmp.ne.s32.totalorder %s33, %s36
    %p42 = scmp.eq.s32.totalorder %s9, 0
    %p43 = por %p41, %p42
    %p44 = scmp.ne.s32.totalorder %s33, %s36
    %p45 = scmp.eq.s32.totalorder %s14, 1
    %p46 = por %p44, %p45
    %p47 = scmp.ne.s32.totalorder %s36, %s37
    %p48 = scmp.eq.s32.totalorder %s14, 0
    %p49 = por %p47, %p48
    %p50 = scmp.ne.s32.totalorder %s36, %s37
    %p51 = scmp.eq.s32.totalorder %s15, 1
    %p52 = por %p50, %p51
    %p54 = scmp.ne.s32.totalorder %s37, %s53
    %p55 = scmp.eq.s32.totalorder %s15, 0
    %p56 = por %p54, %p55
    %s58 = sadd.s32 %s57, 1
    %p61 = scmp.eq.s32.totalorder %s9, 1
    %p62 = scmp.ne.s32.totalorder %s57, %s59
    %p63 = scmp.eq.s32.totalorder %s9, 0
    %p64 = por %p62, %p63
    %p65 = scmp.ne.s32.totalorder %s57, %s59
    %p66 = scmp.eq.s32.totalorder %s14, 1
    %p67 = por %p65, %p66
    %p68 = scmp.ne.s32.totalorder %s59, %s60
    %p69 = scmp.eq.s32.totalorder %s14, 0
    %p70 = por %p68, %p69
    %p71 = scmp.ne.s32.totalorder %s59, %s60
    %p72 = scmp.eq.s32.totalorder %s15, 1
    %p73 = por %p71, %p72
    %p75 = scmp.ne.s32.totalorder %s60, %s74
    %p76 = scmp.eq.s32.totalorder %s15, 0
    %p77 = por %p75, %p76
    %s79 = sadd.s32 %s78, 1
    %p82 = scmp.eq.s32.totalorder %s9, 1
    %p83 = scmp.ne.s32.totalorder %s78, %s80
    %p84 = scmp.eq.s32.totalorder %s9, 0
    %p85 = por %p83, %p84
    %p86 = scmp.ne.s32.totalorder %s78, %s80
    %p87 = scmp.eq.s32.totalorder %s14, 1
    %p88 = por %p86, %p87
    %p89 = scmp.ne.s32.totalorder %s80, %s81
    %p90 = scmp.eq.s32.totalorder %s14, 0
    %p91 = por %p89, %p90
    %p92 = scmp.ne.s32.totalorder %s80, %s81
    %p93 = scmp.eq.s32.totalorder %s15, 1
    %p94 = por %p92, %p93
    %p96 = scmp.ne.s32.totalorder %s81, %s95
    %p97 = scmp.eq.s32.totalorder %s15, 0
    %p98 = por %p96, %p97
    %p99 = scmp.le.s32.totalorder 1, %s9
    %p100 = scmp.lt.s32.totalorder %s9, 3
    %p101 = pnand %p99, %p100
    %p102 = pneg %p101
    // Predicated region
    $region9: #{ccbn_forward.2} parent=5 // pred_check
      _
    $region10: #{ccbn_forward.2} parent=5 // pred_check_branch
      %104 = sbr.rel (%p101) target = $region12
    $region11: #{ccbn_forward.2} parent=5 // pred_region
      %s105 = ssub.s32 %s9, 1
    $region12: #{ccbn_forward.2} parent=5 // pred_fallthru
      _
    %p106 = scmp.lt.s32.totalorder %s9, 2
    // Predicated region
    $region13: #{ccbn_forward.2} parent=5 // pred_check
      %p107 = pneg %p106
    $region14: #{ccbn_forward.2} parent=5 // pred_check_branch
      %109 = sbr.rel (%p107) target = $region16
    $region15: #{ccbn_forward.2} parent=5 // pred_region
      // Predicated region
      $region17: #{ccbn_forward.2} parent=15 // pred_check
        %p110 = pneg %p43
      $region18: #{ccbn_forward.2} parent=15 // pred_check_branch
        %112 = sbr.rel (%p110) target = $region20
      $region19: #{ccbn_forward.2} parent=15 // pred_region
        %s113 = smul.u32 8, %s17
        %p114 = scmp.lt.s32.totalorder %s16, 1
        %s115 = scalar_select %p114, %s16, 1
        %p116 = scmp.lt.s32.totalorder %s113, 7
        %s117 = scalar_select %p116, %s113, 7
        %s118 = smul.addr %s115, 8
        %s119 = sadd.s32 %s117, %s118
        %s120 = smul.addr %s119, 8
        %s121 = scalar_lea.vmem %s0, %s120
        %s122 = smul.u32 8, %s17
      $region20: #{ccbn_forward.2} parent=15 // pred_fallthru
        _
    $region16: #{ccbn_forward.2} parent=5 // pred_fallthru
      _
    %p123 = scmp.le.s32.totalorder 1, %s9
    %p124 = scmp.lt.s32.totalorder %s9, 3
    %p125 = pnand %p123, %p124
    %p126 = pneg %p125
    // Predicated region
    $region21: #{ccbn_forward.2} parent=5 // pred_check
      _
    $region22: #{ccbn_forward.2} parent=5 // pred_check_branch
      %128 = sbr.rel (%p125) target = $region24
    $region23: #{ccbn_forward.2} parent=5 // pred_region
      %s129 = ssub.s32 %s9, 1
      %s130 = smul.u32 8, %s19
      %p131 = scmp.lt.s32.totalorder %s18, 1
      %s132 = scalar_select %p131, %s18, 1
      %p133 = scmp.lt.s32.totalorder %s130, 7
      %s134 = scalar_select %p133, %s130, 7
      %s135 = smul.addr %s132, 8
      %s136 = sadd.s32 %s134, %s135
      %s137 = smul.addr %s136, 8
      %s138 = scalar_lea.vmem %s0, %s137
      %p139 = pneg %p49
      %p140 = pneg %p46
      %p141 = pneg %p70
      %p142 = pneg %p67
      %p143 = pneg %p91
      %p144 = pneg %p88
      %s145 = smul.u32 8, %s19
      %p146 = scmp.lt.s32.totalorder %s18, 1
      %s147 = scalar_select %p146, %s18, 1
      %p148 = scmp.lt.s32.totalorder %s145, 7
      %s149 = scalar_select %p148, %s145, 7
      %s150 = smul.addr %s147, 8
      %s151 = sadd.s32 %s149, %s150
      %s152 = smul.addr %s151, 8
      %s153 = scalar_lea.vmem %s0, %s152
      %s154 = smul.u32 8, %s19
      %p155 = scmp.eq.s32.totalorder %s18, 0
      %p156 = scmp.eq.s32.totalorder %s19, 0
      %p157 = pnand %p155, %p156
      %p158 = pneg %p157
      // Predicated region
      $region25: #{ccbn_forward.2} parent=23 // pred_check
        _
      $region26: #{ccbn_forward.2} parent=23 // pred_check_branch
        %160 = sbr.rel (%p157) target = $region28
      $region27: #{ccbn_forward.2} parent=23 // pred_region
        %161 = vst [vmem:[%s1] sm:$0xff] 0.0
        %162 = vst [vmem:[%s1 + $0x8] sm:$0xff] 0.0
        %163 = vst [vmem:[%s1 + $0x10] sm:$0xff] 0.0
        %164 = vst [vmem:[%s1 + $0x18] sm:$0xff] 0.0
        %165 = vst [vmem:[%s1 + $0x20] sm:$0xff] 0.0
        %166 = vst [vmem:[%s1 + $0x28] sm:$0xff] 0.0
        %167 = vst [vmem:[%s1 + $0x30] sm:$0xff] 0.0
        %168 = vst [vmem:[%s1 + $0x38] sm:$0xff] 0.0
        %169 = vst [vmem:[%s2] sm:$0xff] 0.0
        %170 = vst [vmem:[%s2 + $0x8] sm:$0xff] 0.0
        %171 = vst [vmem:[%s2 + $0x10] sm:$0xff] 0.0
        %172 = vst [vmem:[%s2 + $0x18] sm:$0xff] 0.0
        %173 = vst [vmem:[%s2 + $0x20] sm:$0xff] 0.0
        %174 = vst [vmem:[%s2 + $0x28] sm:$0xff] 0.0
        %175 = vst [vmem:[%s2 + $0x30] sm:$0xff] 0.0
        %176 = vst [vmem:[%s2 + $0x38] sm:$0xff] 0.0
      $region28: #{ccbn_forward.2} parent=23 // pred_fallthru
        _
      %v177 = vld [vmem:[%s153] sm:$0xff]
      %v178 = vld [vmem:[%s153 + $0x8] sm:$0xff]
      %v179 = vld [vmem:[%s153 + $0x10] sm:$0xff]
      %v180 = vld [vmem:[%s153 + $0x18] sm:$0xff]
      %v181 = vld [vmem:[%s153 + $0x20] sm:$0xff]
      %v182 = vld [vmem:[%s153 + $0x28] sm:$0xff]
      %v183 = vld [vmem:[%s153 + $0x30] sm:$0xff]
      %v184 = vld [vmem:[%s153 + $0x38] sm:$0xff]
      %v185 = vld [vmem:[%s1] sm:$0xff]
      %v186 = vld [vmem:[%s1 + $0x8] sm:$0xff]
      %v187 = vld [vmem:[%s1 + $0x10] sm:$0xff]
      %v188 = vld [vmem:[%s1 + $0x18] sm:$0xff]
      %v189 = vld [vmem:[%s1 + $0x20] sm:$0xff]
      %v190 = vld [vmem:[%s1 + $0x28] sm:$0xff]
      %v191 = vld [vmem:[%s1 + $0x30] sm:$0xff]
      %v192 = vld [vmem:[%s1 + $0x38] sm:$0xff]
      %v193 = vadd.f32 %v185, %v177
      %v194 = vadd.f32 %v186, %v178
      %v195 = vadd.f32 %v187, %v179
      %v196 = vadd.f32 %v188, %v180
      %v197 = vadd.f32 %v189, %v181
      %v198 = vadd.f32 %v190, %v182
      %v199 = vadd.f32 %v191, %v183
      %v200 = vadd.f32 %v192, %v184
      %201 = vst [vmem:[%s1] sm:$0xff] %v193
      %202 = vst [vmem:[%s1 + $0x8] sm:$0xff] %v194
      %203 = vst [vmem:[%s1 + $0x10] sm:$0xff] %v195
      %204 = vst [vmem:[%s1 + $0x18] sm:$0xff] %v196
      %205 = vst [vmem:[%s1 + $0x20] sm:$0xff] %v197
      %206 = vst [vmem:[%s1 + $0x28] sm:$0xff] %v198
      %207 = vst [vmem:[%s1 + $0x30] sm:$0xff] %v199
      %208 = vst [vmem:[%s1 + $0x38] sm:$0xff] %v200
      %v209 = vld [vmem:[%s2] sm:$0xff]
      %v210 = vld [vmem:[%s2 + $0x8] sm:$0xff]
      %v211 = vld [vmem:[%s2 + $0x10] sm:$0xff]
      %v212 = vld [vmem:[%s2 + $0x18] sm:$0xff]
      %v213 = vld [vmem:[%s2 + $0x20] sm:$0xff]
      %v214 = vld [vmem:[%s2 + $0x28] sm:$0xff]
      %v215 = vld [vmem:[%s2 + $0x30] sm:$0xff]
      %v216 = vld [vmem:[%s2 + $0x38] sm:$0xff]
      %v217 = vmul.f32 %v177, %v177
      %v218 = vmul.f32 %v178, %v178
      %v219 = vmul.f32 %v179, %v179
      %v220 = vmul.f32 %v180, %v180
      %v221 = vmul.f32 %v181, %v181
      %v222 = vmul.f32 %v182, %v182
      %v223 = vmul.f32 %v183, %v183
      %v224 = vmul.f32 %v184, %v184
      %v225 = vadd.f32 %v209, %v217
      %v226 = vadd.f32 %v210, %v218
      %v227 = vadd.f32 %v211, %v219
      %v228 = vadd.f32 %v212, %v220
      %v229 = vadd.f32 %v213, %v221
      %v230 = vadd.f32 %v214, %v222
      %v231 = vadd.f32 %v215, %v223
      %v232 = vadd.f32 %v216, %v224
      %233 = vst [vmem:[%s2] sm:$0xff] %v225
      %234 = vst [vmem:[%s2 + $0x8] sm:$0xff] %v226
      %235 = vst [vmem:[%s2 + $0x10] sm:$0xff] %v227
      %236 = vst [vmem:[%s2 + $0x18] sm:$0xff] %v228
      %237 = vst [vmem:[%s2 + $0x20] sm:$0xff] %v229
      %238 = vst [vmem:[%s2 + $0x28] sm:$0xff] %v230
      %239 = vst [vmem:[%s2 + $0x30] sm:$0xff] %v231
      %240 = vst [vmem:[%s2 + $0x38] sm:$0xff] %v232
      // Predicated region
      $region29: #{ccbn_forward.2} parent=23 // pred_check
        %p241 = pneg %p67
      $region30: #{ccbn_forward.2} parent=23 // pred_check_branch
        %243 = sbr.rel (%p241) target = $region32
      $region31: #{ccbn_forward.2} parent=23 // pred_region
        _
      $region32: #{ccbn_forward.2} parent=23 // pred_fallthru
        _
      // Predicated region
      $region33: #{ccbn_forward.2} parent=23 // pred_check
        %p244 = pneg %p88
      $region34: #{ccbn_forward.2} parent=23 // pred_check_branch
        %246 = sbr.rel (%p244) target = $region36
      $region35: #{ccbn_forward.2} parent=23 // pred_region
        _
      $region36: #{ccbn_forward.2} parent=23 // pred_fallthru
        _
      // Predicated region
      $region37: #{ccbn_forward.2} parent=23 // pred_check
        %p247 = pneg %p67
      $region38: #{ccbn_forward.2} parent=23 // pred_check_branch
        %249 = sbr.rel (%p247) target = $region40
      $region39: #{ccbn_forward.2} parent=23 // pred_region
        _
      $region40: #{ccbn_forward.2} parent=23 // pred_fallthru
        _
      // Predicated region
      $region41: #{ccbn_forward.2} parent=23 // pred_check
        %p250 = pneg %p88
      $region42: #{ccbn_forward.2} parent=23 // pred_check_branch
        %252 = sbr.rel (%p250) target = $region44
      $region43: #{ccbn_forward.2} parent=23 // pred_region
        _
      $region44: #{ccbn_forward.2} parent=23 // pred_fallthru
        _
    $region24: #{ccbn_forward.2} parent=5 // pred_fallthru
      _
    %p253 = scmp.le.s32.totalorder 2, %s9
    // Predicated region
    $region45: #{ccbn_forward.2} parent=5 // pred_check
      %p254 = pneg %p253
    $region46: #{ccbn_forward.2} parent=5 // pred_check_branch
      %256 = sbr.rel (%p254) target = $region48
    $region47: #{ccbn_forward.2} parent=5 // pred_region
      %s257 = ssub.s32 %s9, 2
    $region48: #{ccbn_forward.2} parent=5 // pred_fallthru
      _
  $region6: #{ccbn_forward.2} parent=0 // loop_footer
    %s13 = sadd.s32 1, %s9
  $region7: #{ccbn_forward.2} parent=0 // loop_footer_branch
    %8 = sbr.rel target = $region3
  $region8: #{ccbn_forward.2} parent=0 // loop_exit
    _

// kernel: ccbn_forward.3
$region0: #{ccbn_forward.3}
  #allocation0 [shape = 'u32[]', space=smem, size = 0x4, offset = 0x4, fixed_abs, tag = 'smem constant byte address 0x4 - core index']
  #allocation1 [shape = 'u32[144,128]{1,0:T(1,128)}', space=vmem, size = 0x12000, scoped, tag = 'internal scratch']
  %s0 = inlined_call_operand.vmem [shape: f32[2,32,256], index: 0, kind: input, shape index: {}]
  %s1 = inlined_call_operand.vmem [shape: f32[2,8,256], index: 1, kind: input, shape index: {}]
  %s2 = inlined_call_operand.vmem [shape: f32[32,8], index: 2, kind: input, shape index: {}]
  %s3 = inlined_call_operand.vmem [shape: f32[32,8], index: 3, kind: input, shape index: {}]
  %s4 = inlined_call_operand.vmem [shape: f32[2,32,256], index: 4, kind: output, shape index: {}]
  %s5 = sld [smem:[#allocation0]]
  $region49: #{ccbn_forward.3} parent=0
    _
  %s7 = ssub.s32 1, %s5
  %s8 = scalar_select 0, %s7, %s5
  loop: start=0, step=1, limit=4
  $region2: #{ccbn_forward.3} parent=0 // loop_pre_header
    _
  $region3: #{ccbn_forward.3} parent=0 // loop_header
    %s10 = sphi 0, %s14
    %p11 = scmp.ge.s32.totalorder %s10, 4
    %s17 = sphi 0, %s29
    %s18 = sphi 0, %s25
    %s19 = sphi 0, %s17
    %s20 = sphi 0, %s18
    %s21 = sphi 0, %s19
    %s22 = sphi 0, %s20
    %s34 = sphi 0, %s36
    %s37 = sphi 0, %s34
    %s38 = sphi 0, %s37
    %s54 = sphi 0, %s38
    %s62 = sphi 0, %s64
    %s65 = sphi 0, %s62
    %s66 = sphi 0, %s65
    %s82 = sphi 0, %s66
    %s86 = sphi 0, %s86
    %s88 = sphi 0, %s86
    %s89 = sphi 0, %s88
    %s103 = sphi 0, %s89
    %s107 = sphi 0, %s107
    %s109 = sphi 0, %s107
    %s110 = sphi 0, %s109
    %s124 = sphi 0, %s110
    %s132 = sphi 0, %s134
    %s135 = sphi 0, %s132
    %s136 = sphi 0, %s135
    %s152 = sphi 0, %s136
  $region4: #{ccbn_forward.3} parent=0 // loop_header_branch
    %13 = sbr.rel (%p11) target = $region8
  $region5: #{ccbn_forward.3} parent=0 // loop_body
    %s15 = ssub.s32 %s10, 1
    %s16 = ssub.s32 %s10, 2
    %s23 = sadd.s32 1, %s18
    %p24 = scmp.ge.s32.totalorder %s23, 1
    %s25 = scalar_select %p24, 0, %s23
    %s26 = sadd.s32 1, %s17
    %s27 = scalar_select %p24, %s26, %s17
    %p28 = scmp.ge.s32.totalorder %s27, 2
    %s29 = scalar_select %p28, 0, %s27
    %s30 = ssub.s32 %s17, %s29
    %s31 = ssub.s32 %s18, %s25
    %s32 = sor.u32 %s30, %s31
    %p33 = scmp.eq.s32.totalorder %s32, 0
    %s35 = sadd.s32 %s34, 1
    %s36 = scalar_select %p33, %s34, %s35
    %p39 = pneg %p33
    %p40 = scmp.eq.s32.totalorder %s10, 1
    %p41 = por %p39, %p40
    %p42 = scmp.ne.s32.totalorder %s34, %s37
    %p43 = scmp.eq.s32.totalorder %s10, 0
    %p44 = por %p42, %p43
    %p45 = scmp.ne.s32.totalorder %s34, %s37
    %p46 = scmp.eq.s32.totalorder %s15, 1
    %p47 = por %p45, %p46
    %p48 = scmp.ne.s32.totalorder %s37, %s38
    %p49 = scmp.eq.s32.totalorder %s15, 0
    %p50 = por %p48, %p49
    %p51 = scmp.ne.s32.totalorder %s37, %s38
    %p52 = scmp.eq.s32.totalorder %s16, 1
    %p53 = por %p51, %p52
    %p55 = scmp.ne.s32.totalorder %s38, %s54
    %p56 = scmp.eq.s32.totalorder %s16, 0
    %p57 = por %p55, %p56
    %s58 = ssub.s32 %s17, %s29
    %s59 = ssub.s32 %s18, %s25
    %s60 = sor.u32 %s58, %s59
    %p61 = scmp.eq.s32.totalorder %s60, 0
    %s63 = sadd.s32 %s62, 1
    %s64 = scalar_select %p61, %s62, %s63
    %p67 = pneg %p61
    %p68 = scmp.eq.s32.totalorder %s10, 1
    %p69 = por %p67, %p68
    %p70 = scmp.ne.s32.totalorder %s62, %s65
    %p71 = scmp.eq.s32.totalorder %s10, 0
    %p72 = por %p70, %p71
    %p73 = scmp.ne.s32.totalorder %s62, %s65
    %p74 = scmp.eq.s32.totalorder %s15, 1
    %p75 = por %p73, %p74
    %p76 = scmp.ne.s32.totalorder %s65, %s66
    %p77 = scmp.eq.s32.totalorder %s15, 0
    %p78 = por %p76, %p77
    %p79 = scmp.ne.s32.totalorder %s65, %s66
    %p80 = scmp.eq.s32.totalorder %s16, 1
    %p81 = por %p79, %p80
    %p83 = scmp.ne.s32.totalorder %s66, %s82
    %p84 = scmp.eq.s32.totalorder %s16, 0
    %p85 = por %p83, %p84
    %s87 = sadd.s32 %s86, 1
    %p90 = scmp.eq.s32.totalorder %s10, 1
    %p91 = scmp.ne.s32.totalorder %s86, %s88
    %p92 = scmp.eq.s32.totalorder %s10, 0
    %p93 = por %p91, %p92
    %p94 = scmp.ne.s32.totalorder %s86, %s88
    %p95 = scmp.eq.s32.totalorder %s15, 1
    %p96 = por %p94, %p95
    %p97 = scmp.ne.s32.totalorder %s88, %s89
    %p98 = scmp.eq.s32.totalorder %s15, 0
    %p99 = por %p97, %p98
    %p100 = scmp.ne.s32.totalorder %s88, %s89
    %p101 = scmp.eq.s32.totalorder %s16, 1
    %p102 = por %p100, %p101
    %p104 = scmp.ne.s32.totalorder %s89, %s103
    %p105 = scmp.eq.s32.totalorder %s16, 0
    %p106 = por %p104, %p105
    %s108 = sadd.s32 %s107, 1
    %p111 = scmp.eq.s32.totalorder %s10, 1
    %p112 = scmp.ne.s32.totalorder %s107, %s109
    %p113 = scmp.eq.s32.totalorder %s10, 0
    %p114 = por %p112, %p113
    %p115 = scmp.ne.s32.totalorder %s107, %s109
    %p116 = scmp.eq.s32.totalorder %s15, 1
    %p117 = por %p115, %p116
    %p118 = scmp.ne.s32.totalorder %s109, %s110
    %p119 = scmp.eq.s32.totalorder %s15, 0
    %p120 = por %p118, %p119
    %p121 = scmp.ne.s32.totalorder %s109, %s110
    %p122 = scmp.eq.s32.totalorder %s16, 1
    %p123 = por %p121, %p122
    %p125 = scmp.ne.s32.totalorder %s110, %s124
    %p126 = scmp.eq.s32.totalorder %s16, 0
    %p127 = por %p125, %p126
    %s128 = ssub.s32 %s17, %s29
    %s129 = ssub.s32 %s18, %s25
    %s130 = sor.u32 %s128, %s129
    %p131 = scmp.eq.s32.totalorder %s130, 0
    %s133 = sadd.s32 %s132, 1
    %s134 = scalar_select %p131, %s132, %s133
    %p137 = pneg %p131
    %p138 = scmp.eq.s32.totalorder %s10, 1
    %p139 = por %p137, %p138
    %p140 = scmp.ne.s32.totalorder %s132, %s135
    %p141 = scmp.eq.s32.totalorder %s10, 0
    %p142 = por %p140, %p141
    %p143 = scmp.ne.s32.totalorder %s132, %s135
    %p144 = scmp.eq.s32.totalorder %s15, 1
    %p145 = por %p143, %p144
    %p146 = scmp.ne.s32.totalorder %s135, %s136
    %p147 = scmp.eq.s32.totalorder %s15, 0
    %p148 = por %p146, %p147
    %p149 = scmp.ne.s32.totalorder %s135, %s136
    %p150 = scmp.eq.s32.totalorder %s16, 1
    %p151 = por %p149, %p150
    %p153 = scmp.ne.s32.totalorder %s136, %s152
    %p154 = scmp.eq.s32.totalorder %s16, 0
    %p155 = por %p153, %p154
    %p156 = scmp.le.s32.totalorder 1, %s10
    %p157 = scmp.lt.s32.totalorder %s10, 3
    %p158 = pnand %p156, %p157
    %p159 = pneg %p158
    // Predicated region
    $region9: #{ccbn_forward.3} parent=5 // pred_check
      _
    $region10: #{ccbn_forward.3} parent=5 // pred_check_branch
      %161 = sbr.rel (%p158) target = $region12
    $region11: #{ccbn_forward.3} parent=5 // pred_region
      %s162 = ssub.s32 %s10, 1
      // Predicated region
      $region13: #{ccbn_forward.3} parent=11 // pred_check
        %p163 = pneg %p99
      $region14: #{ccbn_forward.3} parent=11 // pred_check_branch
        %165 = sbr.rel (%p163) target = $region16
      $region15: #{ccbn_forward.3} parent=11 // pred_region
        _
      $region16: #{ccbn_forward.3} parent=11 // pred_fallthru
        _
      // Predicated region
      $region17: #{ccbn_forward.3} parent=11 // pred_check
        %p166 = pneg %p120
      $region18: #{ccbn_forward.3} parent=11 // pred_check_branch
        %168 = sbr.rel (%p166) target = $region20
      $region19: #{ccbn_forward.3} parent=11 // pred_region
        _
      $region20: #{ccbn_forward.3} parent=11 // pred_fallthru
        _
    $region12: #{ccbn_forward.3} parent=5 // pred_fallthru
      _
    %p169 = scmp.lt.s32.totalorder %s10, 2
    // Predicated region
    $region21: #{ccbn_forward.3} parent=5 // pred_check
      %p170 = pneg %p169
    $region22: #{ccbn_forward.3} parent=5 // pred_check_branch
      %172 = sbr.rel (%p170) target = $region24
    $region23: #{ccbn_forward.3} parent=5 // pred_region
      // Predicated region
      $region25: #{ccbn_forward.3} parent=23 // pred_check
        %p173 = pneg %p44
      $region26: #{ccbn_forward.3} parent=23 // pred_check_branch
        %175 = sbr.rel (%p173) target = $region28
      $region27: #{ccbn_forward.3} parent=23 // pred_region
        %s176 = smul.u32 2, %s18
        %p177 = scmp.lt.s32.totalorder %s17, 1
        %s178 = scalar_select %p177, %s17, 1
        %p179 = scmp.lt.s32.totalorder %s176, 1
        %s180 = scalar_select %p179, %s176, 1
        %s181 = smul.addr %s178, 8
        %s182 = sadd.s32 %s180, %s181
        %s183 = smul.addr %s182, 8
        %s184 = scalar_lea.vmem %s0, %s183
        %s185 = smul.u32 2, %s18
      $region28: #{ccbn_forward.3} parent=23 // pred_fallthru
        _
      // Predicated region
      $region29: #{ccbn_forward.3} parent=23 // pred_check
        %p186 = pneg %p72
      $region30: #{ccbn_forward.3} parent=23 // pred_check_branch
        %188 = sbr.rel (%p186) target = $region32
      $region31: #{ccbn_forward.3} parent=23 // pred_region
        %s189 = smul.u32 2, %s18
        %p190 = scmp.lt.s32.totalorder %s17, 1
        %s191 = scalar_select %p190, %s17, 1
        %p192 = scmp.lt.s32.totalorder %s189, 1
        %s193 = scalar_select %p192, %s189, 1
        %s194 = smul.addr %s191, 2
        %s195 = sadd.s32 %s193, %s194
        %s196 = smul.addr %s195, 8
        %s197 = scalar_lea.vmem %s1, %s196
        %s198 = smul.u32 2, %s18
      $region32: #{ccbn_forward.3} parent=23 // pred_fallthru
        _
    $region24: #{ccbn_forward.3} parent=5 // pred_fallthru
      _
    %p199 = scmp.le.s32.totalorder 1, %s10
    %p200 = scmp.lt.s32.totalorder %s10, 3
    %p201 = pnand %p199, %p200
    %p202 = pneg %p201
    // Predicated region
    $region33: #{ccbn_forward.3} parent=5 // pred_check
      _
    $region34: #{ccbn_forward.3} parent=5 // pred_check_branch
      %204 = sbr.rel (%p201) target = $region36
    $region35: #{ccbn_forward.3} parent=5 // pred_region
      %s205 = ssub.s32 %s10, 1
      %s206 = smul.u32 2, %s20
      %p207 = scmp.lt.s32.totalorder %s19, 1
      %s208 = scalar_select %p207, %s19, 1
      %p209 = scmp.lt.s32.totalorder %s206, 1
      %s210 = scalar_select %p209, %s206, 1
      %s211 = smul.addr %s208, 8
      %s212 = sadd.s32 %s210, %s211
      %s213 = smul.addr %s212, 8
      %s214 = scalar_lea.vmem %s0, %s213
      %p215 = pneg %p50
      %p216 = pneg %p47
      %s217 = smul.u32 2, %s20
      %p218 = scmp.lt.s32.totalorder %s19, 1
      %s219 = scalar_select %p218, %s19, 1
      %p220 = scmp.lt.s32.totalorder %s217, 1
      %s221 = scalar_select %p220, %s217, 1
      %s222 = smul.addr %s219, 2
      %s223 = sadd.s32 %s221, %s222
      %s224 = smul.addr %s223, 8
      %s225 = scalar_lea.vmem %s1, %s224
      %p226 = pneg %p78
      %p227 = pneg %p75
      %p228 = pneg %p99
      %p229 = pneg %p96
      %p230 = pneg %p120
      %p231 = pneg %p117
      %p232 = pneg %p148
      %p233 = pneg %p145
      %s234 = smul.u32 2, %s20
      %p235 = scmp.lt.s32.totalorder %s19, 1
      %s236 = scalar_select %p235, %s19, 1
      %p237 = scmp.lt.s32.totalorder %s234, 1
      %s238 = scalar_select %p237, %s234, 1
      %s239 = smul.addr %s236, 8
      %s240 = sadd.s32 %s238, %s239
      %s241 = smul.addr %s240, 8
      %s242 = scalar_lea.vmem %s4, %s241
      %s243 = smul.u32 2, %s20
      %p244 = scmp.lt.s32.totalorder %s19, 1
      %s245 = scalar_select %p244, %s19, 1
      %p246 = scmp.lt.s32.totalorder %s243, 1
      %s247 = scalar_select %p246, %s243, 1
      %s248 = smul.addr %s245, 8
      %s249 = sadd.s32 %s247, %s248
      %s250 = smul.addr %s249, 8
      %s251 = scalar_lea.vmem %s0, %s250
      %s252 = smul.u32 2, %s20
      %s253 = smul.u32 2, %s20
      %p254 = scmp.lt.s32.totalorder %s19, 1
      %s255 = scalar_select %p254, %s19, 1
      %p256 = scmp.lt.s32.totalorder %s253, 1
      %s257 = scalar_select %p256, %s253, 1
      %s258 = smul.addr %s255, 2
      %s259 = sadd.s32 %s257, %s258
      %s260 = smul.addr %s259, 8
      %s261 = scalar_lea.vmem %s1, %s260
      %s262 = smul.u32 2, %s20
      %s263 = smul.u32 2, %s20
      %p264 = scmp.lt.s32.totalorder %s19, 1
      %s265 = scalar_select %p264, %s19, 1
      %p266 = scmp.lt.s32.totalorder %s263, 1
      %s267 = scalar_select %p266, %s263, 1
      %s268 = smul.addr %s265, 8
      %s269 = sadd.s32 %s267, %s268
      %s270 = smul.addr %s269, 8
      %s271 = scalar_lea.vmem %s4, %s270
      %s272 = smul.u32 2, %s20
      %v273 = vld [vmem:[%s251] sm:$0xff]
      %v274 = vld [vmem:[%s251 + $0x8] sm:$0xff]
      %v275 = vld [vmem:[%s251 + $0x10] sm:$0xff]
      %v276 = vld [vmem:[%s251 + $0x18] sm:$0xff]
      %v277 = vld [vmem:[%s251 + $0x20] sm:$0xff]
      %v278 = vld [vmem:[%s251 + $0x28] sm:$0xff]
      %v279 = vld [vmem:[%s251 + $0x30] sm:$0xff]
      %v280 = vld [vmem:[%s251 + $0x38] sm:$0xff]
      %v281 = vld [vmem:[%s261] sm:$0xff]
      %v282 = vld [vmem:[%s261 + $0x8] sm:$0xff]
      %v283 = vld [vmem:[%s2] sm:$0xff]
      %v284 = vld [vmem:[%s2 + $0x8] sm:$0xff]
      %v285 = vld [vmem:[%s2 + $0x10] sm:$0xff]
      %v286 = vld [vmem:[%s2 + $0x18] sm:$0xff]
      %vm287 = vcmask 64512
      %v289 = vsel %vm287, %v283, 0
      %v292 = vsel %vm287, %v284, 0
      %v295 = vsel %vm287, %v285, 0
      %v298 = vsel %vm287, %v286, 0
      %300 = vmatprep.subr.mxu0 0.0
      %301 = vmatpush1.msra.mxu0 0.0
      %302 = vmatprep.subr.mxu0 0.0
      %303 = vmatpush1.msra.mxu0 0.0
      %304 = vmatprep.subr.mxu0 0.0
      %305 = vmatpush1.msra.mxu0 0.0
      %306 = vmatprep.subr.mxu0 0.0
      %307 = vmatpush1.msra.mxu0 0.0
      %308 = vmatprep.subr.mxu0 0.0
      %309 = vmatpush1.msra.mxu0 0.0
      %310 = vmatprep.subr.mxu0 0.0
      %311 = vmatpush1.msra.mxu0 0.0
      %312 = vmatprep.subr.mxu0 0.0
      %313 = vmatpush1.msra.mxu0 0.0
      %314 = vmatprep.subr.mxu0 0.0
      %315 = vmatpush1.msra.mxu0 0.0
      %316 = vmatprep.subr.mxu0 0.0
      %317 = vmatpush1.msra.mxu0 0.0
      %318 = vmatprep.subr.mxu0 0.0
      %319 = vmatpush1.msra.mxu0 0.0
      %320 = vmatprep.subr.mxu0 0.0
      %321 = vmatpush1.msra.mxu0 0.0
      %322 = vmatprep.subr.mxu0 0.0
      %323 = vmatpush1.msra.mxu0 0.0
      %324 = vmatprep.subr.mxu0 0.0
      %325 = vmatpush1.msra.mxu0 0.0
      %326 = vmatprep.subr.mxu0 0.0
      %327 = vmatpush1.msra.mxu0 0.0
      %328 = vmatprep.subr.mxu0 0.0
      %329 = vmatpush1.msra.mxu0 0.0
      %330 = vmatprep.subr.mxu0 %v282
      %331 = vmatpush1.msra.mxu0 %v281
      %332 = vmatprep.subr.mxu0 0.0
      %333 = vmatpush2.msra.mxu0 0.0
      %334 = vmatprep.subr.mxu0 0.0
      %335 = vmatpush2.msra.mxu0 0.0
      %336 = vmatprep.subr.mxu0 0.0
      %337 = vmatpush2.msra.mxu0 0.0
      %338 = vmatprep.subr.mxu0 0.0
      %339 = vmatpush2.msra.mxu0 0.0
      %340 = vmatprep.subr.mxu0 0.0
      %341 = vmatpush2.msra.mxu0 0.0
      %342 = vmatprep.subr.mxu0 0.0
      %343 = vmatpush2.msra.mxu0 0.0
      %344 = vmatprep.subr.mxu0 0.0
      %345 = vmatpush2.msra.mxu0 0.0
      %346 = vmatprep.subr.mxu0 0.0
      %347 = vmatpush2.msra.mxu0 0.0
      %348 = vmatprep.subr.mxu0 0.0
      %349 = vmatpush2.msra.mxu0 0.0
      %350 = vmatprep.subr.mxu0 0.0
      %351 = vmatpush2.msra.mxu0 0.0
      %352 = vmatprep.subr.mxu0 0.0
      %353 = vmatpush2.msra.mxu0 0.0
      %354 = vmatprep.subr.mxu0 0.0
      %355 = vmatpush2.msra.mxu0 0.0
      %356 = vmatprep.subr.mxu0 0.0
      %357 = vmatpush2.msra.mxu0 0.0
      %358 = vmatprep.subr.mxu0 0.0
      %359 = vmatpush2.msra.mxu0 0.0
      %360 = vmatprep.subr.mxu0 0.0
      %361 = vmatpush2.msra.mxu0 0.0
      %362 = vmatprep.subr.mxu0 0.0
      %363 = vmatpush2.msra.mxu0 0.0
      %364 = vmatprep.mubr.f32.mxu0 0.0
      %365 = vmatmul.mubr.f32.gmra.mxu0 %v289
      %v366 = vpop.f32.mrf.mxu0
      %v367 = vadd.f32 0.0, %v366
      %v368 = vpop.f32.mrf.mxu0
      %v369 = vadd.f32 0.0, %v368
      %370 = vmatprep.mubr.f32.mxu0 0.0
      %371 = vmatmul.mubr.f32.gmra.mxu0 %v292
      %v372 = vpop.f32.mrf.mxu0
      %v373 = vadd.f32 0.0, %v372
      %v374 = vpop.f32.mrf.mxu0
      %v375 = vadd.f32 0.0, %v374
      %376 = vmatprep.mubr.f32.mxu0 0.0
      %377 = vmatmul.mubr.f32.gmra.mxu0 %v295
      %v378 = vpop.f32.mrf.mxu0
      %v379 = vadd.f32 0.0, %v378
      %v380 = vpop.f32.mrf.mxu0
      %v381 = vadd.f32 0.0, %v380
      %382 = vmatprep.mubr.f32.mxu0 0.0
      %383 = vmatmul.mubr.f32.gmra.mxu0 %v298
      %v384 = vpop.f32.mrf.mxu0
      %v385 = vadd.f32 0.0, %v384
      %v386 = vpop.f32.mrf.mxu0
      %v387 = vadd.f32 0.0, %v386
      %388 = vdwg.mxu0
      %v389 = vld [vmem:[%s3] sm:$0xff]
      %v390 = vld [vmem:[%s3 + $0x8] sm:$0xff]
      %v391 = vld [vmem:[%s3 + $0x10] sm:$0xff]
      %v392 = vld [vmem:[%s3 + $0x18] sm:$0xff]
      %v394 = vsel %vm287, %v389, 0
      %v397 = vsel %vm287, %v390, 0
      %v400 = vsel %vm287, %v391, 0
      %v403 = vsel %vm287, %v392, 0
      %405 = vmatprep.subr.mxu0 0.0
      %406 = vmatpush1.msra.mxu0 0.0
      %407 = vmatprep.subr.mxu0 0.0
      %408 = vmatpush1.msra.mxu0 0.0
      %409 = vmatprep.subr.mxu0 0.0
      %410 = vmatpush1.msra.mxu0 0.0
      %411 = vmatprep.subr.mxu0 0.0
      %412 = vmatpush1.msra.mxu0 0.0
      %413 = vmatprep.subr.mxu0 0.0
      %414 = vmatpush1.msra.mxu0 0.0
      %415 = vmatprep.subr.mxu0 0.0
      %416 = vmatpush1.msra.mxu0 0.0
      %417 = vmatprep.subr.mxu0 0.0
      %418 = vmatpush1.msra.mxu0 0.0
      %419 = vmatprep.subr.mxu0 0.0
      %420 = vmatpush1.msra.mxu0 0.0
      %421 = vmatprep.subr.mxu0 0.0
      %422 = vmatpush1.msra.mxu0 0.0
      %423 = vmatprep.subr.mxu0 0.0
      %424 = vmatpush1.msra.mxu0 0.0
      %425 = vmatprep.subr.mxu0 0.0
      %426 = vmatpush1.msra.mxu0 0.0
      %427 = vmatprep.subr.mxu0 0.0
      %428 = vmatpush1.msra.mxu0 0.0
      %429 = vmatprep.subr.mxu0 0.0
      %430 = vmatpush1.msra.mxu0 0.0
      %431 = vmatprep.subr.mxu0 0.0
      %432 = vmatpush1.msra.mxu0 0.0
      %433 = vmatprep.subr.mxu0 0.0
      %434 = vmatpush1.msra.mxu0 0.0
      %435 = vmatprep.subr.mxu0 %v282
      %436 = vmatpush1.msra.mxu0 %v281
      %437 = vmatprep.subr.mxu0 0.0
      %438 = vmatpush2.msra.mxu0 0.0
      %439 = vmatprep.subr.mxu0 0.0
      %440 = vmatpush2.msra.mxu0 0.0
      %441 = vmatprep.subr.mxu0 0.0
      %442 = vmatpush2.msra.mxu0 0.0
      %443 = vmatprep.subr.mxu0 0.0
      %444 = vmatpush2.msra.mxu0 0.0
      %445 = vmatprep.subr.mxu0 0.0
      %446 = vmatpush2.msra.mxu0 0.0
      %447 = vmatprep.subr.mxu0 0.0
      %448 = vmatpush2.msra.mxu0 0.0
      %449 = vmatprep.subr.mxu0 0.0
      %450 = vmatpush2.msra.mxu0 0.0
      %451 = vmatprep.subr.mxu0 0.0
      %452 = vmatpush2.msra.mxu0 0.0
      %453 = vmatprep.subr.mxu0 0.0
      %454 = vmatpush2.msra.mxu0 0.0
      %455 = vmatprep.subr.mxu0 0.0
      %456 = vmatpush2.msra.mxu0 0.0
      %457 = vmatprep.subr.mxu0 0.0
      %458 = vmatpush2.msra.mxu0 0.0
      %459 = vmatprep.subr.mxu0 0.0
      %460 = vmatpush2.msra.mxu0 0.0
      %461 = vmatprep.subr.mxu0 0.0
      %462 = vmatpush2.msra.mxu0 0.0
      %463 = vmatprep.subr.mxu0 0.0
      %464 = vmatpush2.msra.mxu0 0.0
      %465 = vmatprep.subr.mxu0 0.0
      %466 = vmatpush2.msra.mxu0 0.0
      %467 = vmatprep.subr.mxu0 0.0
      %468 = vmatpush2.msra.mxu0 0.0
      %469 = vmatprep.mubr.f32.mxu0 0.0
      %470 = vmatmul.mubr.f32.gmra.mxu0 %v394
      %v471 = vpop.f32.mrf.mxu0
      %v472 = vadd.f32 0.0, %v471
      %v473 = vpop.f32.mrf.mxu0
      %v474 = vadd.f32 0.0, %v473
      %475 = vmatprep.mubr.f32.mxu0 0.0
      %476 = vmatmul.mubr.f32.gmra.mxu0 %v397
      %v477 = vpop.f32.mrf.mxu0
      %v478 = vadd.f32 0.0, %v477
      %v479 = vpop.f32.mrf.mxu0
      %v480 = vadd.f32 0.0, %v479
      %481 = vmatprep.mubr.f32.mxu0 0.0
      %482 = vmatmul.mubr.f32.gmra.mxu0 %v400
      %v483 = vpop.f32.mrf.mxu0
      %v484 = vadd.f32 0.0, %v483
      %v485 = vpop.f32.mrf.mxu0
      %v486 = vadd.f32 0.0, %v485
      %487 = vmatprep.mubr.f32.mxu0 0.0
      %488 = vmatmul.mubr.f32.gmra.mxu0 %v403
      %v489 = vpop.f32.mrf.mxu0
      %v490 = vadd.f32 0.0, %v489
      %v491 = vpop.f32.mrf.mxu0
      %v492 = vadd.f32 0.0, %v491
      %493 = vdwg.mxu0
      %v494 = vmul.f32 %v273, %v367
      %v495 = vmul.f32 %v274, %v369
      %v496 = vmul.f32 %v275, %v373
      %v497 = vmul.f32 %v276, %v375
      %v498 = vmul.f32 %v277, %v379
      %v499 = vmul.f32 %v278, %v381
      %v500 = vmul.f32 %v279, %v385
      %v501 = vmul.f32 %v280, %v387
      %v502 = vadd.f32 %v494, %v472
      %v503 = vadd.f32 %v495, %v474
      %v504 = vadd.f32 %v496, %v478
      %v505 = vadd.f32 %v497, %v480
      %v506 = vadd.f32 %v498, %v484
      %v507 = vadd.f32 %v499, %v486
      %v508 = vadd.f32 %v500, %v490
      %v509 = vadd.f32 %v501, %v492
      %510 = vst [vmem:[%s271] sm:$0xff] %v502
      %511 = vst [vmem:[%s271 + $0x8] sm:$0xff] %v503
      %512 = vst [vmem:[%s271 + $0x10] sm:$0xff] %v504
      %513 = vst [vmem:[%s271 + $0x18] sm:$0xff] %v505
      %514 = vst [vmem:[%s271 + $0x20] sm:$0xff] %v506
      %515 = vst [vmem:[%s271 + $0x28] sm:$0xff] %v507
      %516 = vst [vmem:[%s271 + $0x30] sm:$0xff] %v508
      %517 = vst [vmem:[%s271 + $0x38] sm:$0xff] %v509
      %s518 = smul.u32 2, %s20
      %p519 = scmp.lt.s32.totalorder %s19, 1
      %s520 = scalar_select %p519, %s19, 1
      %p521 = scmp.lt.s32.totalorder %s518, 1
      %s522 = scalar_select %p521, %s518, 1
      %s523 = smul.addr %s520, 8
      %s524 = sadd.s32 %s522, %s523
      %s525 = smul.addr %s524, 8
      %s526 = scalar_lea.vmem %s4, %s525
      // Predicated region
      $region37: #{ccbn_forward.3} parent=35 // pred_check
        %p527 = pneg %p145
      $region38: #{ccbn_forward.3} parent=35 // pred_check_branch
        %529 = sbr.rel (%p527) target = $region40
      $region39: #{ccbn_forward.3} parent=35 // pred_region
        %s530 = smul.u32 2, %s20
      $region40: #{ccbn_forward.3} parent=35 // pred_fallthru
        _
    $region36: #{ccbn_forward.3} parent=5 // pred_fallthru
      _
    %p531 = scmp.le.s32.totalorder 2, %s10
    // Predicated region
    $region41: #{ccbn_forward.3} parent=5 // pred_check
      %p532 = pneg %p531
    $region42: #{ccbn_forward.3} parent=5 // pred_check_branch
      %534 = sbr.rel (%p532) target = $region44
    $region43: #{ccbn_forward.3} parent=5 // pred_region
      %s535 = ssub.s32 %s10, 2
      // Predicated region
      $region45: #{ccbn_forward.3} parent=43 // pred_check
        %p536 = pneg %p151
      $region46: #{ccbn_forward.3} parent=43 // pred_check_branch
        %538 = sbr.rel (%p536) target = $region48
      $region47: #{ccbn_forward.3} parent=43 // pred_region
        %s539 = smul.u32 2, %s22
        %p540 = scmp.lt.s32.totalorder %s21, 1
        %s541 = scalar_select %p540, %s21, 1
        %p542 = scmp.lt.s32.totalorder %s539, 1
        %s543 = scalar_select %p542, %s539, 1
        %s544 = smul.addr %s541, 8
        %s545 = sadd.s32 %s543, %s544
        %s546 = smul.addr %s545, 8
        %s547 = scalar_lea.vmem %s4, %s546
      $region48: #{ccbn_forward.3} parent=43 // pred_fallthru
        _
    $region44: #{ccbn_forward.3} parent=5 // pred_fallthru
      _
  $region6: #{ccbn_forward.3} parent=0 // loop_footer
    %s14 = sadd.s32 1, %s10
  $region7: #{ccbn_forward.3} parent=0 // loop_footer_branch
    %9 = sbr.rel target = $region3
  $region8: #{ccbn_forward.3} parent=0 // loop_exit
    _

</llo_original>
